<compile_context>
chip_gen: v6e
topology: v6e:2x2x1
jax: 0.10.0
libtpu: 0.0.40
codegen_flags: <defaults>
</compile_context>

<pallas_src>
import functools

import jax
import jax.numpy as jnp
from jax.experimental import pallas as pl
from jax.experimental.pallas import tpu as pltpu


def _rnn_linear_kernel(x_ref, h0_ref, wih_t_ref, whh_t_ref, b_ref,
                       wfc_t_ref, bfc_ref, out_ref, hn_ref,
                       ph_scr, *, seq_len, batch):
    """Single-invocation kernel: whole sequence resident in VMEM.

    x_ref:     (S*B, I)  time-major inputs flattened over (seq, batch)
    h0_ref:    (B, H)    initial hidden state (batch padded to sublane multiple)
    wih_t_ref: (I, H)    W_ih^T (pre-transposed)
    whh_t_ref: (H, H)    W_hh^T (pre-transposed)
    b_ref:     (1, H)    fused bias  b_ih + b_hh
    wfc_t_ref: (H, O)    W_fc^T (pre-transposed)
    bfc_ref:   (1, O)    fc bias
    out_ref:   (S*B, O)  fc output for every time step
    hn_ref:    (B, H)    final hidden state
    ph_scr:    VMEM (S*B, H) scratch: holds input projection P, overwritten
               in place by the hidden states h_t as the recurrence proceeds.
    """
    # Phase 1: input projection hoisted out of the recurrence -> one big matmul.
    ph_scr[...] = (
        jnp.dot(x_ref[...], wih_t_ref[...], preferred_element_type=jnp.float32)
        + b_ref[...]
    )

    # Phase 2: the only serial part:  h_t = tanh(P_t + h_{t-1} @ W_hh^T).
    whh_t = whh_t_ref[...]           # load once; stays in vregs across steps

    def step(t, h_prev):
        r = pl.multiple_of(t * batch, batch)
        pre = ph_scr[pl.ds(r, batch), :] + jnp.dot(
            h_prev, whh_t, preferred_element_type=jnp.float32)
        h_t = jnp.tanh(pre)
        ph_scr[pl.ds(r, batch), :] = h_t   # overwrite P_t with h_t (read-once)
        return h_t

    h_last = jax.lax.fori_loop(
        0, seq_len, step, h0_ref[...].astype(jnp.float32), unroll=True)

    hn_ref[...] = h_last.astype(hn_ref.dtype)

    # Phase 3: FC hoisted out of the time loop -> one big (S*B, H) x (H, O) matmul.
    out_ref[...] = (
        jnp.dot(ph_scr[...], wfc_t_ref[...], preferred_element_type=jnp.float32)
        + bfc_ref[...]
    ).astype(out_ref.dtype)


@jax.jit
def many_to_one_with_linear(x, init_h, params):
    """x: (B, S, I) batch_first, init_h: (1, B, H). Returns (out (B,S,O), hn (1,B,H))."""
    w_ih = params["w_ih"]
    w_hh = params["w_hh"]
    b_ih = params["b_ih"]
    b_hh = params["b_hh"]
    w_fc = params["w_fc"]
    b_fc = params["b_fc"]

    B, S, I = x.shape
    H = w_ih.shape[0]
    O = w_fc.shape[0]

    # Pad batch to a sublane multiple (8) so the (B, H) working tiles fill sublanes.
    Bp = ((B + 7) // 8) * 8
    pad = Bp - B

    x_tm = jnp.transpose(x, (1, 0, 2))                   # (S, B, I) time-major
    h0 = init_h[0]                                       # (B, H)
    if pad:
        x_tm = jnp.pad(x_tm, ((0, 0), (0, pad), (0, 0)))
        h0 = jnp.pad(h0, ((0, pad), (0, 0)))
    x2 = x_tm.reshape(S * Bp, I)                         # (S*Bp, I)

    # Pre-transpose weights once; fuse the two RNN biases.
    wih_t = w_ih.T                                       # (I, H)
    whh_t = w_hh.T                                       # (H, H)
    wfc_t = w_fc.T                                       # (H, O)
    b = (b_ih + b_hh).reshape(1, H)
    bfc = b_fc.reshape(1, O)

    kernel = functools.partial(_rnn_linear_kernel, seq_len=S, batch=Bp)
    full = lambda shape: pl.BlockSpec(shape, lambda i: (0,) * len(shape))

    out2, hn_p = pl.pallas_call(
        kernel,
        out_shape=(
            jax.ShapeDtypeStruct((S * Bp, O), x.dtype),
            jax.ShapeDtypeStruct((Bp, H), x.dtype),
        ),
        grid_spec=pltpu.PrefetchScalarGridSpec(
            num_scalar_prefetch=0,
            grid=(1,),
            in_specs=[
                full((S * Bp, I)),   # x (flattened, time-major)
                full((Bp, H)),       # h0
                full((I, H)),        # W_ih^T
                full((H, H)),        # W_hh^T
                full((1, H)),        # fused RNN bias
                full((H, O)),        # W_fc^T
                full((1, O)),        # fc bias
            ],
            out_specs=[
                full((S * Bp, O)),   # out (all steps)
                full((Bp, H)),       # hn
            ],
            scratch_shapes=[
                pltpu.VMEM((S * Bp, H), jnp.float32),    # P, reused for hidden states
            ],
        ),
        compiler_params=pltpu.CompilerParams(
            dimension_semantics=("arbitrary",),
        ),
    )(x2, h0, wih_t, whh_t, b, wfc_t, bfc)

    out = out2.reshape(S, Bp, O)[:, :B, :]               # drop batch padding
    out = jnp.transpose(out, (1, 0, 2))                  # back to (B, S, O)
    hn = hn_p[:B][None]                                  # (1, B, H)
    return out, hn


def _reference(x, init_h, params):
    """Pure-JAX reference (lax.scan) for correctness checking."""
    w_ih, w_hh, b_ih, b_hh, w_fc, b_fc = (
        params["w_ih"], params["w_hh"], params["b_ih"],
        params["b_hh"], params["w_fc"], params["b_fc"],
    )

    def step(h, x_t):
        h_new = jnp.tanh(x_t @ w_ih.T + b_ih + h @ w_hh.T + b_hh)
        return h_new, h_new

    x_tm = jnp.transpose(x, (1, 0, 2))
    hn, hs = jax.lax.scan(step, init_h[0], x_tm)
    out = hs @ w_fc.T + b_fc
    return jnp.transpose(out, (1, 0, 2)), hn[None]


if __name__ == "__main__":
    # Small shapes consistent with the module's forward.
    batch, seq, input_dim, hidden_dim, output_dim = 2, 8, 4, 32, 16

    key = jax.random.PRNGKey(0)
    keys = jax.random.split(key, 8)
    bound = 1.0 / (hidden_dim ** 0.5)
    params = {
        "w_ih": jax.random.uniform(keys[0], (hidden_dim, input_dim), jnp.float32, -bound, bound),
        "w_hh": jax.random.uniform(keys[1], (hidden_dim, hidden_dim), jnp.float32, -bound, bound),
        "b_ih": jax.random.uniform(keys[2], (hidden_dim,), jnp.float32, -bound, bound),
        "b_hh": jax.random.uniform(keys[3], (hidden_dim,), jnp.float32, -bound, bound),
        "w_fc": jax.random.uniform(keys[4], (output_dim, hidden_dim), jnp.float32, -bound, bound),
        "b_fc": jax.random.uniform(keys[5], (output_dim,), jnp.float32, -bound, bound),
    }

    x = jax.random.normal(keys[6], (batch, seq, input_dim), jnp.float32)
    init_h = jax.random.normal(keys[7], (1, batch, hidden_dim), jnp.float32)

    out, hn = many_to_one_with_linear(x, init_h, params)
    out, hn = jax.block_until_ready((out, hn))

    ref_out, ref_hn = _reference(x, init_h, params)
    assert out.shape == (batch, seq, output_dim)
    assert hn.shape == (1, batch, hidden_dim)
    assert jnp.allclose(out, ref_out, atol=1e-5, rtol=1e-5)
    assert jnp.allclose(hn, ref_hn, atol=1e-5, rtol=1e-5)

    print("KERNEL_OK")
</pallas_src>

<mosaic_0001>
module attributes {stable_mosaic.version = 11 : i64} {
  func.func @_rnn_linear_kernel(%arg0: i32, %arg1: memref<64x4xf32, #tpu.memory_space<vmem>>, %arg2: memref<8x32xf32, #tpu.memory_space<vmem>>, %arg3: memref<4x32xf32, #tpu.memory_space<vmem>>, %arg4: memref<32x32xf32, #tpu.memory_space<vmem>>, %arg5: memref<1x32xf32, #tpu.memory_space<vmem>>, %arg6: memref<32x16xf32, #tpu.memory_space<vmem>>, %arg7: memref<1x16xf32, #tpu.memory_space<vmem>>, %arg8: memref<64x16xf32, #tpu.memory_space<vmem>>, %arg9: memref<8x32xf32, #tpu.memory_space<vmem>>, %arg10: memref<64x32xf32, #tpu.memory_space<vmem>>) attributes {dimension_semantics = [#tpu.dimension_semantics<arbitrary>], iteration_bounds = array<i64: 1>, scalar_prefetch = 0 : i64, scratch_operands = 1 : i64, tpu.core_type = #tpu.core_type<tc>, window_params = [{pipeline_mode = #tpu.pipeline_mode<synchronous>, transform_indices = @transform_0, window_bounds = array<i64: 64, 4>}, {pipeline_mode = #tpu.pipeline_mode<synchronous>, transform_indices = @transform_1, window_bounds = array<i64: 8, 32>}, {pipeline_mode = #tpu.pipeline_mode<synchronous>, transform_indices = @transform_2, window_bounds = array<i64: 4, 32>}, {pipeline_mode = #tpu.pipeline_mode<synchronous>, transform_indices = @transform_3, window_bounds = array<i64: 32, 32>}, {pipeline_mode = #tpu.pipeline_mode<synchronous>, transform_indices = @transform_4, window_bounds = array<i64: 1, 32>}, {pipeline_mode = #tpu.pipeline_mode<synchronous>, transform_indices = @transform_5, window_bounds = array<i64: 32, 16>}, {pipeline_mode = #tpu.pipeline_mode<synchronous>, transform_indices = @transform_6, window_bounds = array<i64: 1, 16>}, {pipeline_mode = #tpu.pipeline_mode<synchronous>, transform_indices = @transform_7, window_bounds = array<i64: 64, 16>}, {pipeline_mode = #tpu.pipeline_mode<synchronous>, transform_indices = @transform_8, window_bounds = array<i64: 8, 32>}]} {
    %c0 = arith.constant 0 : index
    %c0_0 = arith.constant 0 : index
    %0 = vector.load %arg1[%c0, %c0_0] : memref<64x4xf32, #tpu.memory_space<vmem>>, vector<64x4xf32>
    %c0_1 = arith.constant 0 : index
    %c0_2 = arith.constant 0 : index
    %1 = vector.load %arg3[%c0_1, %c0_2] : memref<4x32xf32, #tpu.memory_space<vmem>>, vector<4x32xf32>
    %cst = arith.constant dense<0.000000e+00> : vector<64x32xf32>
    %2 = tpu.matmul %0, %1, %cst {dimension_numbers = #tpu.dot_dimension_numbers<[1], [0], [0], [1], [0, 0, 1, 1], [], []>} : vector<64x4xf32>, vector<4x32xf32>, vector<64x32xf32> -> vector<64x32xf32>
    %c0_3 = arith.constant 0 : index
    %c0_4 = arith.constant 0 : index
    %3 = vector.load %arg5[%c0_3, %c0_4] : memref<1x32xf32, #tpu.memory_space<vmem>>, vector<1x32xf32>
    %4 = vector.broadcast %3 : vector<1x32xf32> to vector<64x32xf32>
    %5 = arith.addf %2, %4 : vector<64x32xf32>
    %c0_5 = arith.constant 0 : index
    %c0_6 = arith.constant 0 : index
    %6 = vector.load %arg10[%c0_5, %c0_6] : memref<64x32xf32, #tpu.memory_space<vmem>>, vector<64x32xf32>
    tpu.vector_store %arg10[%c0_5, %c0_6], %5 {strides = array<i32>} : memref<64x32xf32, #tpu.memory_space<vmem>>, vector<64x32xf32>,
    %c0_7 = arith.constant 0 : index
    %c0_8 = arith.constant 0 : index
    %7 = vector.load %arg4[%c0_7, %c0_8] : memref<32x32xf32, #tpu.memory_space<vmem>>, vector<32x32xf32>
    %c0_9 = arith.constant 0 : index
    %c0_10 = arith.constant 0 : index
    %8 = vector.load %arg2[%c0_9, %c0_10] : memref<8x32xf32, #tpu.memory_space<vmem>>, vector<8x32xf32>
    %c0_i32 = arith.constant 0 : i32
    %c8_i32 = arith.constant 8 : i32
    %9 = arith.muli %c0_i32, %c8_i32 : i32
    %10 = tpu.assume_multiple %9, 8 : i32
    %11 = arith.index_cast %10 : i32 to index
    %c0_11 = arith.constant 0 : index
    %12 = vector.load %arg10[%11, %c0_11] : memref<64x32xf32, #tpu.memory_space<vmem>>, vector<8x32xf32>
    %cst_12 = arith.constant dense<0.000000e+00> : vector<8x32xf32>
    %13 = tpu.matmul %8, %7, %cst_12 {dimension_numbers = #tpu.dot_dimension_numbers<[1], [0], [0], [1], [0, 0, 1, 1], [], []>} : vector<8x32xf32>, vector<32x32xf32>, vector<8x32xf32> -> vector<8x32xf32>
    %14 = arith.addf %12, %13 : vector<8x32xf32>
    %15 = math.tanh %14 : vector<8x32xf32>
    %16 = arith.index_cast %10 : i32 to index
    %c0_13 = arith.constant 0 : index
    %17 = vector.load %arg10[%16, %c0_13] : memref<64x32xf32, #tpu.memory_space<vmem>>, vector<8x32xf32>
    tpu.vector_store %arg10[%16, %c0_13], %15 {strides = array<i32>} : memref<64x32xf32, #tpu.memory_space<vmem>>, vector<8x32xf32>,
    %c1_i32 = arith.constant 1 : i32
    %c8_i32_14 = arith.constant 8 : i32
    %18 = arith.muli %c1_i32, %c8_i32_14 : i32
    %19 = tpu.assume_multiple %18, 8 : i32
    %20 = arith.index_cast %19 : i32 to index
    %c0_15 = arith.constant 0 : index
    %21 = vector.load %arg10[%20, %c0_15] : memref<64x32xf32, #tpu.memory_space<vmem>>, vector<8x32xf32>
    %cst_16 = arith.constant dense<0.000000e+00> : vector<8x32xf32>
    %22 = tpu.matmul %15, %7, %cst_16 {dimension_numbers = #tpu.dot_dimension_numbers<[1], [0], [0], [1], [0, 0, 1, 1], [], []>} : vector<8x32xf32>, vector<32x32xf32>, vector<8x32xf32> -> vector<8x32xf32>
    %23 = arith.addf %21, %22 : vector<8x32xf32>
    %24 = math.tanh %23 : vector<8x32xf32>
    %25 = arith.index_cast %19 : i32 to index
    %c0_17 = arith.constant 0 : index
    %26 = vector.load %arg10[%25, %c0_17] : memref<64x32xf32, #tpu.memory_space<vmem>>, vector<8x32xf32>
    tpu.vector_store %arg10[%25, %c0_17], %24 {strides = array<i32>} : memref<64x32xf32, #tpu.memory_space<vmem>>, vector<8x32xf32>,
    %c2_i32 = arith.constant 2 : i32
    %c8_i32_18 = arith.constant 8 : i32
    %27 = arith.muli %c2_i32, %c8_i32_18 : i32
    %28 = tpu.assume_multiple %27, 8 : i32
    %29 = arith.index_cast %28 : i32 to index
    %c0_19 = arith.constant 0 : index
    %30 = vector.load %arg10[%29, %c0_19] : memref<64x32xf32, #tpu.memory_space<vmem>>, vector<8x32xf32>
    %cst_20 = arith.constant dense<0.000000e+00> : vector<8x32xf32>
    %31 = tpu.matmul %24, %7, %cst_20 {dimension_numbers = #tpu.dot_dimension_numbers<[1], [0], [0], [1], [0, 0, 1, 1], [], []>} : vector<8x32xf32>, vector<32x32xf32>, vector<8x32xf32> -> vector<8x32xf32>
    %32 = arith.addf %30, %31 : vector<8x32xf32>
    %33 = math.tanh %32 : vector<8x32xf32>
    %34 = arith.index_cast %28 : i32 to index
    %c0_21 = arith.constant 0 : index
    %35 = vector.load %arg10[%34, %c0_21] : memref<64x32xf32, #tpu.memory_space<vmem>>, vector<8x32xf32>
    tpu.vector_store %arg10[%34, %c0_21], %33 {strides = array<i32>} : memref<64x32xf32, #tpu.memory_space<vmem>>, vector<8x32xf32>,
    %c3_i32 = arith.constant 3 : i32
    %c8_i32_22 = arith.constant 8 : i32
    %36 = arith.muli %c3_i32, %c8_i32_22 : i32
    %37 = tpu.assume_multiple %36, 8 : i32
    %38 = arith.index_cast %37 : i32 to index
    %c0_23 = arith.constant 0 : index
    %39 = vector.load %arg10[%38, %c0_23] : memref<64x32xf32, #tpu.memory_space<vmem>>, vector<8x32xf32>
    %cst_24 = arith.constant dense<0.000000e+00> : vector<8x32xf32>
    %40 = tpu.matmul %33, %7, %cst_24 {dimension_numbers = #tpu.dot_dimension_numbers<[1], [0], [0], [1], [0, 0, 1, 1], [], []>} : vector<8x32xf32>, vector<32x32xf32>, vector<8x32xf32> -> vector<8x32xf32>
    %41 = arith.addf %39, %40 : vector<8x32xf32>
    %42 = math.tanh %41 : vector<8x32xf32>
    %43 = arith.index_cast %37 : i32 to index
    %c0_25 = arith.constant 0 : index
    %44 = vector.load %arg10[%43, %c0_25] : memref<64x32xf32, #tpu.memory_space<vmem>>, vector<8x32xf32>
    tpu.vector_store %arg10[%43, %c0_25], %42 {strides = array<i32>} : memref<64x32xf32, #tpu.memory_space<vmem>>, vector<8x32xf32>,
    %c4_i32 = arith.constant 4 : i32
    %c8_i32_26 = arith.constant 8 : i32
    %45 = arith.muli %c4_i32, %c8_i32_26 : i32
    %46 = tpu.assume_multiple %45, 8 : i32
    %47 = arith.index_cast %46 : i32 to index
    %c0_27 = arith.constant 0 : index
    %48 = vector.load %arg10[%47, %c0_27] : memref<64x32xf32, #tpu.memory_space<vmem>>, vector<8x32xf32>
    %cst_28 = arith.constant dense<0.000000e+00> : vector<8x32xf32>
    %49 = tpu.matmul %42, %7, %cst_28 {dimension_numbers = #tpu.dot_dimension_numbers<[1], [0], [0], [1], [0, 0, 1, 1], [], []>} : vector<8x32xf32>, vector<32x32xf32>, vector<8x32xf32> -> vector<8x32xf32>
    %50 = arith.addf %48, %49 : vector<8x32xf32>
    %51 = math.tanh %50 : vector<8x32xf32>
    %52 = arith.index_cast %46 : i32 to index
    %c0_29 = arith.constant 0 : index
    %53 = vector.load %arg10[%52, %c0_29] : memref<64x32xf32, #tpu.memory_space<vmem>>, vector<8x32xf32>
    tpu.vector_store %arg10[%52, %c0_29], %51 {strides = array<i32>} : memref<64x32xf32, #tpu.memory_space<vmem>>, vector<8x32xf32>,
    %c5_i32 = arith.constant 5 : i32
    %c8_i32_30 = arith.constant 8 : i32
    %54 = arith.muli %c5_i32, %c8_i32_30 : i32
    %55 = tpu.assume_multiple %54, 8 : i32
    %56 = arith.index_cast %55 : i32 to index
    %c0_31 = arith.constant 0 : index
    %57 = vector.load %arg10[%56, %c0_31] : memref<64x32xf32, #tpu.memory_space<vmem>>, vector<8x32xf32>
    %cst_32 = arith.constant dense<0.000000e+00> : vector<8x32xf32>
    %58 = tpu.matmul %51, %7, %cst_32 {dimension_numbers = #tpu.dot_dimension_numbers<[1], [0], [0], [1], [0, 0, 1, 1], [], []>} : vector<8x32xf32>, vector<32x32xf32>, vector<8x32xf32> -> vector<8x32xf32>
    %59 = arith.addf %57, %58 : vector<8x32xf32>
    %60 = math.tanh %59 : vector<8x32xf32>
    %61 = arith.index_cast %55 : i32 to index
    %c0_33 = arith.constant 0 : index
    %62 = vector.load %arg10[%61, %c0_33] : memref<64x32xf32, #tpu.memory_space<vmem>>, vector<8x32xf32>
    tpu.vector_store %arg10[%61, %c0_33], %60 {strides = array<i32>} : memref<64x32xf32, #tpu.memory_space<vmem>>, vector<8x32xf32>,
    %c6_i32 = arith.constant 6 : i32
    %c8_i32_34 = arith.constant 8 : i32
    %63 = arith.muli %c6_i32, %c8_i32_34 : i32
    %64 = tpu.assume_multiple %63, 8 : i32
    %65 = arith.index_cast %64 : i32 to index
    %c0_35 = arith.constant 0 : index
    %66 = vector.load %arg10[%65, %c0_35] : memref<64x32xf32, #tpu.memory_space<vmem>>, vector<8x32xf32>
    %cst_36 = arith.constant dense<0.000000e+00> : vector<8x32xf32>
    %67 = tpu.matmul %60, %7, %cst_36 {dimension_numbers = #tpu.dot_dimension_numbers<[1], [0], [0], [1], [0, 0, 1, 1], [], []>} : vector<8x32xf32>, vector<32x32xf32>, vector<8x32xf32> -> vector<8x32xf32>
    %68 = arith.addf %66, %67 : vector<8x32xf32>
    %69 = math.tanh %68 : vector<8x32xf32>
    %70 = arith.index_cast %64 : i32 to index
    %c0_37 = arith.constant 0 : index
    %71 = vector.load %arg10[%70, %c0_37] : memref<64x32xf32, #tpu.memory_space<vmem>>, vector<8x32xf32>
    tpu.vector_store %arg10[%70, %c0_37], %69 {strides = array<i32>} : memref<64x32xf32, #tpu.memory_space<vmem>>, vector<8x32xf32>,
    %c7_i32 = arith.constant 7 : i32
    %c8_i32_38 = arith.constant 8 : i32
    %72 = arith.muli %c7_i32, %c8_i32_38 : i32
    %73 = tpu.assume_multiple %72, 8 : i32
    %74 = arith.index_cast %73 : i32 to index
    %c0_39 = arith.constant 0 : index
    %75 = vector.load %arg10[%74, %c0_39] : memref<64x32xf32, #tpu.memory_space<vmem>>, vector<8x32xf32>
    %cst_40 = arith.constant dense<0.000000e+00> : vector<8x32xf32>
    %76 = tpu.matmul %69, %7, %cst_40 {dimension_numbers = #tpu.dot_dimension_numbers<[1], [0], [0], [1], [0, 0, 1, 1], [], []>} : vector<8x32xf32>, vector<32x32xf32>, vector<8x32xf32> -> vector<8x32xf32>
    %77 = arith.addf %75, %76 : vector<8x32xf32>
    %78 = math.tanh %77 : vector<8x32xf32>
    %79 = arith.index_cast %73 : i32 to index
    %c0_41 = arith.constant 0 : index
    %80 = vector.load %arg10[%79, %c0_41] : memref<64x32xf32, #tpu.memory_space<vmem>>, vector<8x32xf32>
    tpu.vector_store %arg10[%79, %c0_41], %78 {strides = array<i32>} : memref<64x32xf32, #tpu.memory_space<vmem>>, vector<8x32xf32>,
    %c8_i32_42 = arith.constant 8 : i32
    %c0_43 = arith.constant 0 : index
    %c0_44 = arith.constant 0 : index
    %81 = vector.load %arg9[%c0_43, %c0_44] : memref<8x32xf32, #tpu.memory_space<vmem>>, vector<8x32xf32>
    tpu.vector_store %arg9[%c0_43, %c0_44], %78 {strides = array<i32>} : memref<8x32xf32, #tpu.memory_space<vmem>>, vector<8x32xf32>,
    %c0_45 = arith.constant 0 : index
    %c0_46 = arith.constant 0 : index
    %82 = vector.load %arg10[%c0_45, %c0_46] : memref<64x32xf32, #tpu.memory_space<vmem>>, vector<64x32xf32>
    %c0_47 = arith.constant 0 : index
    %c0_48 = arith.constant 0 : index
    %83 = vector.load %arg6[%c0_47, %c0_48] : memref<32x16xf32, #tpu.memory_space<vmem>>, vector<32x16xf32>
    %cst_49 = arith.constant dense<0.000000e+00> : vector<64x16xf32>
    %84 = tpu.matmul %82, %83, %cst_49 {dimension_numbers = #tpu.dot_dimension_numbers<[1], [0], [0], [1], [0, 0, 1, 1], [], []>} : vector<64x32xf32>, vector<32x16xf32>, vector<64x16xf32> -> vector<64x16xf32>
    %c0_50 = arith.constant 0 : index
    %c0_51 = arith.constant 0 : index
    %85 = vector.load %arg7[%c0_50, %c0_51] : memref<1x16xf32, #tpu.memory_space<vmem>>, vector<1x16xf32>
    %86 = vector.broadcast %85 : vector<1x16xf32> to vector<64x16xf32>
    %87 = arith.addf %84, %86 : vector<64x16xf32>
    %c0_52 = arith.constant 0 : index
    %c0_53 = arith.constant 0 : index
    %88 = vector.load %arg8[%c0_52, %c0_53] : memref<64x16xf32, #tpu.memory_space<vmem>>, vector<64x16xf32>
    tpu.vector_store %arg8[%c0_52, %c0_53], %87 {strides = array<i32>} : memref<64x16xf32, #tpu.memory_space<vmem>>, vector<64x16xf32>,
    return
  }
  func.func @transform_0(%arg0: i32) -> (i32, i32) {
    %c0_i32 = arith.constant 0 : i32
    %c0_i32_0 = arith.constant 0 : i32
    %c0_i32_1 = arith.constant 0 : i32
    return %c0_i32, %c0_i32_0 : i32, i32
  }
  func.func @transform_1(%arg0: i32) -> (i32, i32) {
    %c0_i32 = arith.constant 0 : i32
    %c0_i32_0 = arith.constant 0 : i32
    %c0_i32_1 = arith.constant 0 : i32
    return %c0_i32, %c0_i32_0 : i32, i32
  }
  func.func @transform_2(%arg0: i32) -> (i32, i32) {
    %c0_i32 = arith.constant 0 : i32
    %c0_i32_0 = arith.constant 0 : i32
    %c0_i32_1 = arith.constant 0 : i32
    return %c0_i32, %c0_i32_0 : i32, i32
  }
  func.func @transform_3(%arg0: i32) -> (i32, i32) {
    %c0_i32 = arith.constant 0 : i32
    %c0_i32_0 = arith.constant 0 : i32
    %c0_i32_1 = arith.constant 0 : i32
    return %c0_i32, %c0_i32_0 : i32, i32
  }
  func.func @transform_4(%arg0: i32) -> (i32, i32) {
    %c0_i32 = arith.constant 0 : i32
    %c0_i32_0 = arith.constant 0 : i32
    %c0_i32_1 = arith.constant 0 : i32
    return %c0_i32, %c0_i32_0 : i32, i32
  }
  func.func @transform_5(%arg0: i32) -> (i32, i32) {
    %c0_i32 = arith.constant 0 : i32
    %c0_i32_0 = arith.constant 0 : i32
    %c0_i32_1 = arith.constant 0 : i32
    return %c0_i32, %c0_i32_0 : i32, i32
  }
  func.func @transform_6(%arg0: i32) -> (i32, i32) {
    %c0_i32 = arith.constant 0 : i32
    %c0_i32_0 = arith.constant 0 : i32
    %c0_i32_1 = arith.constant 0 : i32
    return %c0_i32, %c0_i32_0 : i32, i32
  }
  func.func @transform_7(%arg0: i32) -> (i32, i32) {
    %c0_i32 = arith.constant 0 : i32
    %c0_i32_0 = arith.constant 0 : i32
    %c0_i32_1 = arith.constant 0 : i32
    return %c0_i32, %c0_i32_0 : i32, i32
  }
  func.func @transform_8(%arg0: i32) -> (i32, i32) {
    %c0_i32 = arith.constant 0 : i32
    %c0_i32_0 = arith.constant 0 : i32
    %c0_i32_1 = arith.constant 0 : i32
    return %c0_i32, %c0_i32_0 : i32, i32
  }
}

</mosaic_0001>

<llo_original>
// kernel: many_to_one_with_linear.1
$region0: #{many_to_one_with_linear.1}
  #allocation0 [shape = 'u32[]', space=smem, size = 0x4, offset = 0x4, fixed_abs, tag = 'smem constant byte address 0x4 - core index']
  #allocation1 [shape = 'u32[144,128]{1,0:T(1,128)}', space=vmem, size = 0x12000, scoped, tag = 'internal scratch']
  #allocation2 [shape = 'f32[64,32]{1,0:T(8,128)}', space=vmem, size = 0x8000, scoped, tag = 'scratch operand']
  %s0 = inlined_call_operand.vmem [shape: f32[64,4], index: 0, kind: input, shape index: {}]
  %s1 = inlined_call_operand.vmem [shape: f32[8,32], index: 1, kind: input, shape index: {}]
  %s2 = inlined_call_operand.vmem [shape: f32[4,32], index: 2, kind: input, shape index: {}]
  %s3 = inlined_call_operand.vmem [shape: f32[32,32], index: 3, kind: input, shape index: {}]
  %s4 = inlined_call_operand.vmem [shape: f32[1,32], index: 4, kind: input, shape index: {}]
  %s5 = inlined_call_operand.vmem [shape: f32[32,16], index: 5, kind: input, shape index: {}]
  %s6 = inlined_call_operand.vmem [shape: f32[1,16], index: 6, kind: input, shape index: {}]
  %s7 = inlined_call_operand.vmem [shape: f32[64,16], index: 7, kind: output, shape index: {0}]
  %s8 = inlined_call_operand.vmem [shape: f32[8,32], index: 8, kind: output, shape index: {1}]
  %9 = xla_tuple %s7, %s8
  %s10 = sld [smem:[#allocation0]]
  $region46: #{many_to_one_with_linear.1} parent=0
    _
  %s12 = ssub.s32 1, %s10
  %s13 = scalar_select 0, %s12, %s10
  // Predicated region
  $region2: #{many_to_one_with_linear.1} parent=0 // pred_check
    _
  $region3: #{many_to_one_with_linear.1} parent=0 // pred_check_branch
    %15 = sbr.rel (0) target = $region5
  $region4: #{many_to_one_with_linear.1} parent=0 // pred_region
    _
  $region5: #{many_to_one_with_linear.1} parent=0 // pred_fallthru
    _
  // Predicated region
  $region6: #{many_to_one_with_linear.1} parent=0 // pred_check
    _
  $region7: #{many_to_one_with_linear.1} parent=0 // pred_check_branch
    %17 = sbr.rel (0) target = $region9
  $region8: #{many_to_one_with_linear.1} parent=0 // pred_region
    _
  $region9: #{many_to_one_with_linear.1} parent=0 // pred_fallthru
    _
  // Predicated region
  $region10: #{many_to_one_with_linear.1} parent=0 // pred_check
    _
  $region11: #{many_to_one_with_linear.1} parent=0 // pred_check_branch
    %19 = sbr.rel (0) target = $region13
  $region12: #{many_to_one_with_linear.1} parent=0 // pred_region
    _
  $region13: #{many_to_one_with_linear.1} parent=0 // pred_fallthru
    _
  // Predicated region
  $region14: #{many_to_one_with_linear.1} parent=0 // pred_check
    _
  $region15: #{many_to_one_with_linear.1} parent=0 // pred_check_branch
    %21 = sbr.rel (0) target = $region17
  $region16: #{many_to_one_with_linear.1} parent=0 // pred_region
    _
  $region17: #{many_to_one_with_linear.1} parent=0 // pred_fallthru
    _
  // Predicated region
  $region18: #{many_to_one_with_linear.1} parent=0 // pred_check
    _
  $region19: #{many_to_one_with_linear.1} parent=0 // pred_check_branch
    %23 = sbr.rel (0) target = $region21
  $region20: #{many_to_one_with_linear.1} parent=0 // pred_region
    _
  $region21: #{many_to_one_with_linear.1} parent=0 // pred_fallthru
    _
  // Predicated region
  $region22: #{many_to_one_with_linear.1} parent=0 // pred_check
    _
  $region23: #{many_to_one_with_linear.1} parent=0 // pred_check_branch
    %25 = sbr.rel (0) target = $region25
  $region24: #{many_to_one_with_linear.1} parent=0 // pred_region
    _
  $region25: #{many_to_one_with_linear.1} parent=0 // pred_fallthru
    _
  // Predicated region
  $region26: #{many_to_one_with_linear.1} parent=0 // pred_check
    _
  $region27: #{many_to_one_with_linear.1} parent=0 // pred_check_branch
    %27 = sbr.rel (0) target = $region29
  $region28: #{many_to_one_with_linear.1} parent=0 // pred_region
    _
  $region29: #{many_to_one_with_linear.1} parent=0 // pred_fallthru
    _
  %v28 = vld [vmem:[%s0] sm:$0xff]
  %v29 = vld [vmem:[%s0 + $0x8] sm:$0xff]
  %v30 = vld [vmem:[%s0 + $0x10] sm:$0xff]
  %v31 = vld [vmem:[%s0 + $0x18] sm:$0xff]
  %v32 = vld [vmem:[%s0 + $0x20] sm:$0xff]
  %v33 = vld [vmem:[%s0 + $0x28] sm:$0xff]
  %v34 = vld [vmem:[%s0 + $0x30] sm:$0xff]
  %v35 = vld [vmem:[%s0 + $0x38] sm:$0xff]
  %v36 = vld [vmem:[%s2] sm:$0xf]
  %v37 = vld [vmem:[%s4] sm:$0x1]
  %v39 = vlaneseq
  %v40 = vshrl.u32 %v39, 7
  %v41 = vsub.s32 0, %v40
  %v42 = vrot.slane %v37, %v41
  %vm44 = vcmask 31744
  %v46 = vsel %vm44, %v28, 0
  %v49 = vsel %vm44, %v29, 0
  %v52 = vsel %vm44, %v30, 0
  %v55 = vsel %vm44, %v31, 0
  %v58 = vsel %vm44, %v32, 0
  %v61 = vsel %vm44, %v33, 0
  %v64 = vsel %vm44, %v34, 0
  %v67 = vsel %vm44, %v35, 0
  %vm69 = vcmask 1043456
  %v71 = vsel %vm69, %v36, 0
  %73 = vmatprep.subr.mxu0 0.0
  %74 = vmatpush1.msra.mxu0 0.0
  %75 = vmatprep.subr.mxu0 0.0
  %76 = vmatpush1.msra.mxu0 0.0
  %77 = vmatprep.subr.mxu0 0.0
  %78 = vmatpush1.msra.mxu0 0.0
  %79 = vmatprep.subr.mxu0 0.0
  %80 = vmatpush1.msra.mxu0 0.0
  %81 = vmatprep.subr.mxu0 0.0
  %82 = vmatpush1.msra.mxu0 0.0
  %83 = vmatprep.subr.mxu0 0.0
  %84 = vmatpush1.msra.mxu0 0.0
  %85 = vmatprep.subr.mxu0 0.0
  %86 = vmatpush1.msra.mxu0 0.0
  %87 = vmatprep.subr.mxu0 0.0
  %88 = vmatpush1.msra.mxu0 0.0
  %89 = vmatprep.subr.mxu0 0.0
  %90 = vmatpush1.msra.mxu0 0.0
  %91 = vmatprep.subr.mxu0 0.0
  %92 = vmatpush1.msra.mxu0 0.0
  %93 = vmatprep.subr.mxu0 0.0
  %94 = vmatpush1.msra.mxu0 0.0
  %95 = vmatprep.subr.mxu0 0.0
  %96 = vmatpush1.msra.mxu0 0.0
  %97 = vmatprep.subr.mxu0 0.0
  %98 = vmatpush1.msra.mxu0 0.0
  %99 = vmatprep.subr.mxu0 0.0
  %100 = vmatpush1.msra.mxu0 0.0
  %101 = vmatprep.subr.mxu0 0.0
  %102 = vmatpush1.msra.mxu0 0.0
  %103 = vmatprep.subr.mxu0 0.0
  %104 = vmatpush1.msra.mxu0 %v71
  %105 = vmatprep.subr.mxu0 0.0
  %106 = vmatpush2.msra.mxu0 0.0
  %107 = vmatprep.subr.mxu0 0.0
  %108 = vmatpush2.msra.mxu0 0.0
  %109 = vmatprep.subr.mxu0 0.0
  %110 = vmatpush2.msra.mxu0 0.0
  %111 = vmatprep.subr.mxu0 0.0
  %112 = vmatpush2.msra.mxu0 0.0
  %113 = vmatprep.subr.mxu0 0.0
  %114 = vmatpush2.msra.mxu0 0.0
  %115 = vmatprep.subr.mxu0 0.0
  %116 = vmatpush2.msra.mxu0 0.0
  %117 = vmatprep.subr.mxu0 0.0
  %118 = vmatpush2.msra.mxu0 0.0
  %119 = vmatprep.subr.mxu0 0.0
  %120 = vmatpush2.msra.mxu0 0.0
  %121 = vmatprep.subr.mxu0 0.0
  %122 = vmatpush2.msra.mxu0 0.0
  %123 = vmatprep.subr.mxu0 0.0
  %124 = vmatpush2.msra.mxu0 0.0
  %125 = vmatprep.subr.mxu0 0.0
  %126 = vmatpush2.msra.mxu0 0.0
  %127 = vmatprep.subr.mxu0 0.0
  %128 = vmatpush2.msra.mxu0 0.0
  %129 = vmatprep.subr.mxu0 0.0
  %130 = vmatpush2.msra.mxu0 0.0
  %131 = vmatprep.subr.mxu0 0.0
  %132 = vmatpush2.msra.mxu0 0.0
  %133 = vmatprep.subr.mxu0 0.0
  %134 = vmatpush2.msra.mxu0 0.0
  %135 = vmatprep.subr.mxu0 0.0
  %136 = vmatpush2.msra.mxu0 0.0
  %137 = vmatprep.mubr.f32.mxu0 0.0
  %138 = vmatmul.mubr.f32.gmra.mxu0 %v46
  %v139 = vpop.f32.mrf.mxu0
  %v140 = vadd.f32 %v42, %v139
  %v141 = vpop.f32.mrf.mxu0
  %142 = vmatprep.mubr.f32.mxu0 0.0
  %143 = vmatmul.mubr.f32.gmra.mxu0 %v49
  %v144 = vpop.f32.mrf.mxu0
  %v145 = vadd.f32 %v42, %v144
  %v146 = vpop.f32.mrf.mxu0
  %147 = vmatprep.mubr.f32.mxu0 0.0
  %148 = vmatmul.mubr.f32.gmra.mxu0 %v52
  %v149 = vpop.f32.mrf.mxu0
  %v150 = vadd.f32 %v42, %v149
  %v151 = vpop.f32.mrf.mxu0
  %152 = vmatprep.mubr.f32.mxu0 0.0
  %153 = vmatmul.mubr.f32.gmra.mxu0 %v55
  %v154 = vpop.f32.mrf.mxu0
  %v155 = vadd.f32 %v42, %v154
  %v156 = vpop.f32.mrf.mxu0
  %157 = vmatprep.mubr.f32.mxu0 0.0
  %158 = vmatmul.mubr.f32.gmra.mxu0 %v58
  %v159 = vpop.f32.mrf.mxu0
  %v160 = vadd.f32 %v42, %v159
  %v161 = vpop.f32.mrf.mxu0
  %162 = vmatprep.mubr.f32.mxu0 0.0
  %163 = vmatmul.mubr.f32.gmra.mxu0 %v61
  %v164 = vpop.f32.mrf.mxu0
  %v165 = vadd.f32 %v42, %v164
  %v166 = vpop.f32.mrf.mxu0
  %167 = vmatprep.mubr.f32.mxu0 0.0
  %168 = vmatmul.mubr.f32.gmra.mxu0 %v64
  %v169 = vpop.f32.mrf.mxu0
  %v170 = vadd.f32 %v42, %v169
  %v171 = vpop.f32.mrf.mxu0
  %172 = vmatprep.mubr.f32.mxu0 0.0
  %173 = vmatmul.mubr.f32.gmra.mxu0 %v67
  %v174 = vpop.f32.mrf.mxu0
  %v175 = vadd.f32 %v42, %v174
  %v176 = vpop.f32.mrf.mxu0
  %177 = vdwg.mxu0
  %vm178 = vcmask 261120
  %179 = vst.msk [vmem:[#allocation2] sm:$0xff] %vm178, %v140
  %180 = vst.msk [vmem:[#allocation2 + $0x8] sm:$0xff] %vm178, %v145
  %181 = vst.msk [vmem:[#allocation2 + $0x10] sm:$0xff] %vm178, %v150
  %182 = vst.msk [vmem:[#allocation2 + $0x18] sm:$0xff] %vm178, %v155
  %183 = vst.msk [vmem:[#allocation2 + $0x20] sm:$0xff] %vm178, %v160
  %184 = vst.msk [vmem:[#allocation2 + $0x28] sm:$0xff] %vm178, %v165
  %185 = vst.msk [vmem:[#allocation2 + $0x30] sm:$0xff] %vm178, %v170
  %186 = vst.msk [vmem:[#allocation2 + $0x38] sm:$0xff] %vm178, %v175
  %v187 = vld [vmem:[%s3] sm:$0xff]
  %v188 = vld [vmem:[%s3 + $0x8] sm:$0xff]
  %v189 = vld [vmem:[%s3 + $0x10] sm:$0xff]
  %v190 = vld [vmem:[%s3 + $0x18] sm:$0xff]
  %v191 = vld [vmem:[%s1] sm:$0xff]
  %v192 = vld [vmem:[#allocation2] sm:$0xff]
  %v194 = vsel %vm178, %v191, 0
  %196 = vmatprep.subr.mxu0 0.0
  %197 = vmatpush1.msra.mxu0 0.0
  %198 = vmatprep.subr.mxu0 0.0
  %199 = vmatpush1.msra.mxu0 0.0
  %200 = vmatprep.subr.mxu0 0.0
  %201 = vmatpush1.msra.mxu0 0.0
  %202 = vmatprep.subr.mxu0 0.0
  %203 = vmatpush1.msra.mxu0 0.0
  %204 = vmatprep.subr.mxu0 0.0
  %205 = vmatpush1.msra.mxu0 0.0
  %206 = vmatprep.subr.mxu0 0.0
  %207 = vmatpush1.msra.mxu0 0.0
  %208 = vmatprep.subr.mxu0 0.0
  %209 = vmatpush1.msra.mxu0 0.0
  %210 = vmatprep.subr.mxu0 0.0
  %211 = vmatpush1.msra.mxu0 0.0
  %212 = vmatprep.subr.mxu0 0.0
  %213 = vmatpush1.msra.mxu0 0.0
  %214 = vmatprep.subr.mxu0 0.0
  %215 = vmatpush1.msra.mxu0 0.0
  %216 = vmatprep.subr.mxu0 0.0
  %217 = vmatpush1.msra.mxu0 0.0
  %218 = vmatprep.subr.mxu0 0.0
  %219 = vmatpush1.msra.mxu0 0.0
  %220 = vmatprep.subr.mxu0 0.0
  %221 = vmatpush1.msra.mxu0 %v190
  %222 = vmatprep.subr.mxu0 0.0
  %223 = vmatpush1.msra.mxu0 %v189
  %224 = vmatprep.subr.mxu0 0.0
  %225 = vmatpush1.msra.mxu0 %v188
  %226 = vmatprep.subr.mxu0 0.0
  %227 = vmatpush1.msra.mxu0 %v187
  %228 = vmatprep.subr.mxu0 0.0
  %229 = vmatpush2.msra.mxu0 0.0
  %230 = vmatprep.subr.mxu0 0.0
  %231 = vmatpush2.msra.mxu0 0.0
  %232 = vmatprep.subr.mxu0 0.0
  %233 = vmatpush2.msra.mxu0 0.0
  %234 = vmatprep.subr.mxu0 0.0
  %235 = vmatpush2.msra.mxu0 0.0
  %236 = vmatprep.subr.mxu0 0.0
  %237 = vmatpush2.msra.mxu0 0.0
  %238 = vmatprep.subr.mxu0 0.0
  %239 = vmatpush2.msra.mxu0 0.0
  %240 = vmatprep.subr.mxu0 0.0
  %241 = vmatpush2.msra.mxu0 0.0
  %242 = vmatprep.subr.mxu0 0.0
  %243 = vmatpush2.msra.mxu0 0.0
  %244 = vmatprep.subr.mxu0 0.0
  %245 = vmatpush2.msra.mxu0 0.0
  %246 = vmatprep.subr.mxu0 0.0
  %247 = vmatpush2.msra.mxu0 0.0
  %248 = vmatprep.subr.mxu0 0.0
  %249 = vmatpush2.msra.mxu0 0.0
  %250 = vmatprep.subr.mxu0 0.0
  %251 = vmatpush2.msra.mxu0 0.0
  %252 = vmatprep.subr.mxu0 0.0
  %253 = vmatpush2.msra.mxu0 0.0
  %254 = vmatprep.subr.mxu0 0.0
  %255 = vmatpush2.msra.mxu0 0.0
  %256 = vmatprep.subr.mxu0 0.0
  %257 = vmatpush2.msra.mxu0 0.0
  %258 = vmatprep.subr.mxu0 0.0
  %259 = vmatpush2.msra.mxu0 0.0
  %260 = vmatprep.mubr.f32.mxu0 0.0
  %261 = vmatmul.mubr.f32.gmra.mxu0 %v194
  %v262 = vpop.f32.mrf.mxu0
  %v263 = vadd.f32 0.0, %v262
  %v264 = vpop.f32.mrf.mxu0
  %265 = vdwg.mxu0
  %v266 = vadd.f32 %v192, %v263
  %v267 = vtanh.pop %v266
  %268 = vst.msk [vmem:[#allocation2] sm:$0xff] %vm178, %v267
  %s269 = scalar_lea.vmem [#allocation2], 8
  %v270 = vld [vmem:[%s269] sm:$0xff]
  %v272 = vsel %vm178, %v267, 0
  %274 = vmatprep.subr.mxu0 0.0
  %275 = vmatpush1.msra.mxu0 0.0
  %276 = vmatprep.subr.mxu0 0.0
  %277 = vmatpush1.msra.mxu0 0.0
  %278 = vmatprep.subr.mxu0 0.0
  %279 = vmatpush1.msra.mxu0 0.0
  %280 = vmatprep.subr.mxu0 0.0
  %281 = vmatpush1.msra.mxu0 0.0
  %282 = vmatprep.subr.mxu0 0.0
  %283 = vmatpush1.msra.mxu0 0.0
  %284 = vmatprep.subr.mxu0 0.0
  %285 = vmatpush1.msra.mxu0 0.0
  %286 = vmatprep.subr.mxu0 0.0
  %287 = vmatpush1.msra.mxu0 0.0
  %288 = vmatprep.subr.mxu0 0.0
  %289 = vmatpush1.msra.mxu0 0.0
  %290 = vmatprep.subr.mxu0 0.0
  %291 = vmatpush1.msra.mxu0 0.0
  %292 = vmatprep.subr.mxu0 0.0
  %293 = vmatpush1.msra.mxu0 0.0
  %294 = vmatprep.subr.mxu0 0.0
  %295 = vmatpush1.msra.mxu0 0.0
  %296 = vmatprep.subr.mxu0 0.0
  %297 = vmatpush1.msra.mxu0 0.0
  %298 = vmatprep.subr.mxu0 0.0
  %299 = vmatpush1.msra.mxu0 %v190
  %300 = vmatprep.subr.mxu0 0.0
  %301 = vmatpush1.msra.mxu0 %v189
  %302 = vmatprep.subr.mxu0 0.0
  %303 = vmatpush1.msra.mxu0 %v188
  %304 = vmatprep.subr.mxu0 0.0
  %305 = vmatpush1.msra.mxu0 %v187
  %306 = vmatprep.subr.mxu0 0.0
  %307 = vmatpush2.msra.mxu0 0.0
  %308 = vmatprep.subr.mxu0 0.0
  %309 = vmatpush2.msra.mxu0 0.0
  %310 = vmatprep.subr.mxu0 0.0
  %311 = vmatpush2.msra.mxu0 0.0
  %312 = vmatprep.subr.mxu0 0.0
  %313 = vmatpush2.msra.mxu0 0.0
  %314 = vmatprep.subr.mxu0 0.0
  %315 = vmatpush2.msra.mxu0 0.0
  %316 = vmatprep.subr.mxu0 0.0
  %317 = vmatpush2.msra.mxu0 0.0
  %318 = vmatprep.subr.mxu0 0.0
  %319 = vmatpush2.msra.mxu0 0.0
  %320 = vmatprep.subr.mxu0 0.0
  %321 = vmatpush2.msra.mxu0 0.0
  %322 = vmatprep.subr.mxu0 0.0
  %323 = vmatpush2.msra.mxu0 0.0
  %324 = vmatprep.subr.mxu0 0.0
  %325 = vmatpush2.msra.mxu0 0.0
  %326 = vmatprep.subr.mxu0 0.0
  %327 = vmatpush2.msra.mxu0 0.0
  %328 = vmatprep.subr.mxu0 0.0
  %329 = vmatpush2.msra.mxu0 0.0
  %330 = vmatprep.subr.mxu0 0.0
  %331 = vmatpush2.msra.mxu0 0.0
  %332 = vmatprep.subr.mxu0 0.0
  %333 = vmatpush2.msra.mxu0 0.0
  %334 = vmatprep.subr.mxu0 0.0
  %335 = vmatpush2.msra.mxu0 0.0
  %336 = vmatprep.subr.mxu0 0.0
  %337 = vmatpush2.msra.mxu0 0.0
  %338 = vmatprep.mubr.f32.mxu0 0.0
  %339 = vmatmul.mubr.f32.gmra.mxu0 %v272
  %v340 = vpop.f32.mrf.mxu0
  %v341 = vadd.f32 0.0, %v340
  %v342 = vpop.f32.mrf.mxu0
  %343 = vdwg.mxu0
  %v344 = vadd.f32 %v270, %v341
  %v345 = vtanh.pop %v344
  %346 = vst.msk [vmem:[%s269] sm:$0xff] %vm178, %v345
  %s347 = scalar_lea.vmem [#allocation2], 16
  %v348 = vld [vmem:[%s347] sm:$0xff]
  %v350 = vsel %vm178, %v345, 0
  %352 = vmatprep.subr.mxu0 0.0
  %353 = vmatpush1.msra.mxu0 0.0
  %354 = vmatprep.subr.mxu0 0.0
  %355 = vmatpush1.msra.mxu0 0.0
  %356 = vmatprep.subr.mxu0 0.0
  %357 = vmatpush1.msra.mxu0 0.0
  %358 = vmatprep.subr.mxu0 0.0
  %359 = vmatpush1.msra.mxu0 0.0
  %360 = vmatprep.subr.mxu0 0.0
  %361 = vmatpush1.msra.mxu0 0.0
  %362 = vmatprep.subr.mxu0 0.0
  %363 = vmatpush1.msra.mxu0 0.0
  %364 = vmatprep.subr.mxu0 0.0
  %365 = vmatpush1.msra.mxu0 0.0
  %366 = vmatprep.subr.mxu0 0.0
  %367 = vmatpush1.msra.mxu0 0.0
  %368 = vmatprep.subr.mxu0 0.0
  %369 = vmatpush1.msra.mxu0 0.0
  %370 = vmatprep.subr.mxu0 0.0
  %371 = vmatpush1.msra.mxu0 0.0
  %372 = vmatprep.subr.mxu0 0.0
  %373 = vmatpush1.msra.mxu0 0.0
  %374 = vmatprep.subr.mxu0 0.0
  %375 = vmatpush1.msra.mxu0 0.0
  %376 = vmatprep.subr.mxu0 0.0
  %377 = vmatpush1.msra.mxu0 %v190
  %378 = vmatprep.subr.mxu0 0.0
  %379 = vmatpush1.msra.mxu0 %v189
  %380 = vmatprep.subr.mxu0 0.0
  %381 = vmatpush1.msra.mxu0 %v188
  %382 = vmatprep.subr.mxu0 0.0
  %383 = vmatpush1.msra.mxu0 %v187
  %384 = vmatprep.subr.mxu0 0.0
  %385 = vmatpush2.msra.mxu0 0.0
  %386 = vmatprep.subr.mxu0 0.0
  %387 = vmatpush2.msra.mxu0 0.0
  %388 = vmatprep.subr.mxu0 0.0
  %389 = vmatpush2.msra.mxu0 0.0
  %390 = vmatprep.subr.mxu0 0.0
  %391 = vmatpush2.msra.mxu0 0.0
  %392 = vmatprep.subr.mxu0 0.0
  %393 = vmatpush2.msra.mxu0 0.0
  %394 = vmatprep.subr.mxu0 0.0
  %395 = vmatpush2.msra.mxu0 0.0
  %396 = vmatprep.subr.mxu0 0.0
  %397 = vmatpush2.msra.mxu0 0.0
  %398 = vmatprep.subr.mxu0 0.0
  %399 = vmatpush2.msra.mxu0 0.0
  %400 = vmatprep.subr.mxu0 0.0
  %401 = vmatpush2.msra.mxu0 0.0
  %402 = vmatprep.subr.mxu0 0.0
  %403 = vmatpush2.msra.mxu0 0.0
  %404 = vmatprep.subr.mxu0 0.0
  %405 = vmatpush2.msra.mxu0 0.0
  %406 = vmatprep.subr.mxu0 0.0
  %407 = vmatpush2.msra.mxu0 0.0
  %408 = vmatprep.subr.mxu0 0.0
  %409 = vmatpush2.msra.mxu0 0.0
  %410 = vmatprep.subr.mxu0 0.0
  %411 = vmatpush2.msra.mxu0 0.0
  %412 = vmatprep.subr.mxu0 0.0
  %413 = vmatpush2.msra.mxu0 0.0
  %414 = vmatprep.subr.mxu0 0.0
  %415 = vmatpush2.msra.mxu0 0.0
  %416 = vmatprep.mubr.f32.mxu0 0.0
  %417 = vmatmul.mubr.f32.gmra.mxu0 %v350
  %v418 = vpop.f32.mrf.mxu0
  %v419 = vadd.f32 0.0, %v418
  %v420 = vpop.f32.mrf.mxu0
  %421 = vdwg.mxu0
  %v422 = vadd.f32 %v348, %v419
  %v423 = vtanh.pop %v422
  %424 = vst.msk [vmem:[%s347] sm:$0xff] %vm178, %v423
  %s425 = scalar_lea.vmem [#allocation2], 24
  %v426 = vld [vmem:[%s425] sm:$0xff]
  %v428 = vsel %vm178, %v423, 0
  %430 = vmatprep.subr.mxu0 0.0
  %431 = vmatpush1.msra.mxu0 0.0
  %432 = vmatprep.subr.mxu0 0.0
  %433 = vmatpush1.msra.mxu0 0.0
  %434 = vmatprep.subr.mxu0 0.0
  %435 = vmatpush1.msra.mxu0 0.0
  %436 = vmatprep.subr.mxu0 0.0
  %437 = vmatpush1.msra.mxu0 0.0
  %438 = vmatprep.subr.mxu0 0.0
  %439 = vmatpush1.msra.mxu0 0.0
  %440 = vmatprep.subr.mxu0 0.0
  %441 = vmatpush1.msra.mxu0 0.0
  %442 = vmatprep.subr.mxu0 0.0
  %443 = vmatpush1.msra.mxu0 0.0
  %444 = vmatprep.subr.mxu0 0.0
  %445 = vmatpush1.msra.mxu0 0.0
  %446 = vmatprep.subr.mxu0 0.0
  %447 = vmatpush1.msra.mxu0 0.0
  %448 = vmatprep.subr.mxu0 0.0
  %449 = vmatpush1.msra.mxu0 0.0
  %450 = vmatprep.subr.mxu0 0.0
  %451 = vmatpush1.msra.mxu0 0.0
  %452 = vmatprep.subr.mxu0 0.0
  %453 = vmatpush1.msra.mxu0 0.0
  %454 = vmatprep.subr.mxu0 0.0
  %455 = vmatpush1.msra.mxu0 %v190
  %456 = vmatprep.subr.mxu0 0.0
  %457 = vmatpush1.msra.mxu0 %v189
  %458 = vmatprep.subr.mxu0 0.0
  %459 = vmatpush1.msra.mxu0 %v188
  %460 = vmatprep.subr.mxu0 0.0
  %461 = vmatpush1.msra.mxu0 %v187
  %462 = vmatprep.subr.mxu0 0.0
  %463 = vmatpush2.msra.mxu0 0.0
  %464 = vmatprep.subr.mxu0 0.0
  %465 = vmatpush2.msra.mxu0 0.0
  %466 = vmatprep.subr.mxu0 0.0
  %467 = vmatpush2.msra.mxu0 0.0
  %468 = vmatprep.subr.mxu0 0.0
  %469 = vmatpush2.msra.mxu0 0.0
  %470 = vmatprep.subr.mxu0 0.0
  %471 = vmatpush2.msra.mxu0 0.0
  %472 = vmatprep.subr.mxu0 0.0
  %473 = vmatpush2.msra.mxu0 0.0
  %474 = vmatprep.subr.mxu0 0.0
  %475 = vmatpush2.msra.mxu0 0.0
  %476 = vmatprep.subr.mxu0 0.0
  %477 = vmatpush2.msra.mxu0 0.0
  %478 = vmatprep.subr.mxu0 0.0
  %479 = vmatpush2.msra.mxu0 0.0
  %480 = vmatprep.subr.mxu0 0.0
  %481 = vmatpush2.msra.mxu0 0.0
  %482 = vmatprep.subr.mxu0 0.0
  %483 = vmatpush2.msra.mxu0 0.0
  %484 = vmatprep.subr.mxu0 0.0
  %485 = vmatpush2.msra.mxu0 0.0
  %486 = vmatprep.subr.mxu0 0.0
  %487 = vmatpush2.msra.mxu0 0.0
  %488 = vmatprep.subr.mxu0 0.0
  %489 = vmatpush2.msra.mxu0 0.0
  %490 = vmatprep.subr.mxu0 0.0
  %491 = vmatpush2.msra.mxu0 0.0
  %492 = vmatprep.subr.mxu0 0.0
  %493 = vmatpush2.msra.mxu0 0.0
  %494 = vmatprep.mubr.f32.mxu0 0.0
  %495 = vmatmul.mubr.f32.gmra.mxu0 %v428
  %v496 = vpop.f32.mrf.mxu0
  %v497 = vadd.f32 0.0, %v496
  %v498 = vpop.f32.mrf.mxu0
  %499 = vdwg.mxu0
  %v500 = vadd.f32 %v426, %v497
  %v501 = vtanh.pop %v500
  %502 = vst.msk [vmem:[%s425] sm:$0xff] %vm178, %v501
  %s503 = scalar_lea.vmem [#allocation2], 32
  %v504 = vld [vmem:[%s503] sm:$0xff]
  %v506 = vsel %vm178, %v501, 0
  %508 = vmatprep.subr.mxu0 0.0
  %509 = vmatpush1.msra.mxu0 0.0
  %510 = vmatprep.subr.mxu0 0.0
  %511 = vmatpush1.msra.mxu0 0.0
  %512 = vmatprep.subr.mxu0 0.0
  %513 = vmatpush1.msra.mxu0 0.0
  %514 = vmatprep.subr.mxu0 0.0
  %515 = vmatpush1.msra.mxu0 0.0
  %516 = vmatprep.subr.mxu0 0.0
  %517 = vmatpush1.msra.mxu0 0.0
  %518 = vmatprep.subr.mxu0 0.0
  %519 = vmatpush1.msra.mxu0 0.0
  %520 = vmatprep.subr.mxu0 0.0
  %521 = vmatpush1.msra.mxu0 0.0
  %522 = vmatprep.subr.mxu0 0.0
  %523 = vmatpush1.msra.mxu0 0.0
  %524 = vmatprep.subr.mxu0 0.0
  %525 = vmatpush1.msra.mxu0 0.0
  %526 = vmatprep.subr.mxu0 0.0
  %527 = vmatpush1.msra.mxu0 0.0
  %528 = vmatprep.subr.mxu0 0.0
  %529 = vmatpush1.msra.mxu0 0.0
  %530 = vmatprep.subr.mxu0 0.0
  %531 = vmatpush1.msra.mxu0 0.0
  %532 = vmatprep.subr.mxu0 0.0
  %533 = vmatpush1.msra.mxu0 %v190
  %534 = vmatprep.subr.mxu0 0.0
  %535 = vmatpush1.msra.mxu0 %v189
  %536 = vmatprep.subr.mxu0 0.0
  %537 = vmatpush1.msra.mxu0 %v188
  %538 = vmatprep.subr.mxu0 0.0
  %539 = vmatpush1.msra.mxu0 %v187
  %540 = vmatprep.subr.mxu0 0.0
  %541 = vmatpush2.msra.mxu0 0.0
  %542 = vmatprep.subr.mxu0 0.0
  %543 = vmatpush2.msra.mxu0 0.0
  %544 = vmatprep.subr.mxu0 0.0
  %545 = vmatpush2.msra.mxu0 0.0
  %546 = vmatprep.subr.mxu0 0.0
  %547 = vmatpush2.msra.mxu0 0.0
  %548 = vmatprep.subr.mxu0 0.0
  %549 = vmatpush2.msra.mxu0 0.0
  %550 = vmatprep.subr.mxu0 0.0
  %551 = vmatpush2.msra.mxu0 0.0
  %552 = vmatprep.subr.mxu0 0.0
  %553 = vmatpush2.msra.mxu0 0.0
  %554 = vmatprep.subr.mxu0 0.0
  %555 = vmatpush2.msra.mxu0 0.0
  %556 = vmatprep.subr.mxu0 0.0
  %557 = vmatpush2.msra.mxu0 0.0
  %558 = vmatprep.subr.mxu0 0.0
  %559 = vmatpush2.msra.mxu0 0.0
  %560 = vmatprep.subr.mxu0 0.0
  %561 = vmatpush2.msra.mxu0 0.0
  %562 = vmatprep.subr.mxu0 0.0
  %563 = vmatpush2.msra.mxu0 0.0
  %564 = vmatprep.subr.mxu0 0.0
  %565 = vmatpush2.msra.mxu0 0.0
  %566 = vmatprep.subr.mxu0 0.0
  %567 = vmatpush2.msra.mxu0 0.0
  %568 = vmatprep.subr.mxu0 0.0
  %569 = vmatpush2.msra.mxu0 0.0
  %570 = vmatprep.subr.mxu0 0.0
  %571 = vmatpush2.msra.mxu0 0.0
  %572 = vmatprep.mubr.f32.mxu0 0.0
  %573 = vmatmul.mubr.f32.gmra.mxu0 %v506
  %v574 = vpop.f32.mrf.mxu0
  %v575 = vadd.f32 0.0, %v574
  %v576 = vpop.f32.mrf.mxu0
  %577 = vdwg.mxu0
  %v578 = vadd.f32 %v504, %v575
  %v579 = vtanh.pop %v578
  %580 = vst.msk [vmem:[%s503] sm:$0xff] %vm178, %v579
  %s581 = scalar_lea.vmem [#allocation2], 40
  %v582 = vld [vmem:[%s581] sm:$0xff]
  %v584 = vsel %vm178, %v579, 0
  %586 = vmatprep.subr.mxu0 0.0
  %587 = vmatpush1.msra.mxu0 0.0
  %588 = vmatprep.subr.mxu0 0.0
  %589 = vmatpush1.msra.mxu0 0.0
  %590 = vmatprep.subr.mxu0 0.0
  %591 = vmatpush1.msra.mxu0 0.0
  %592 = vmatprep.subr.mxu0 0.0
  %593 = vmatpush1.msra.mxu0 0.0
  %594 = vmatprep.subr.mxu0 0.0
  %595 = vmatpush1.msra.mxu0 0.0
  %596 = vmatprep.subr.mxu0 0.0
  %597 = vmatpush1.msra.mxu0 0.0
  %598 = vmatprep.subr.mxu0 0.0
  %599 = vmatpush1.msra.mxu0 0.0
  %600 = vmatprep.subr.mxu0 0.0
  %601 = vmatpush1.msra.mxu0 0.0
  %602 = vmatprep.subr.mxu0 0.0
  %603 = vmatpush1.msra.mxu0 0.0
  %604 = vmatprep.subr.mxu0 0.0
  %605 = vmatpush1.msra.mxu0 0.0
  %606 = vmatprep.subr.mxu0 0.0
  %607 = vmatpush1.msra.mxu0 0.0
  %608 = vmatprep.subr.mxu0 0.0
  %609 = vmatpush1.msra.mxu0 0.0
  %610 = vmatprep.subr.mxu0 0.0
  %611 = vmatpush1.msra.mxu0 %v190
  %612 = vmatprep.subr.mxu0 0.0
  %613 = vmatpush1.msra.mxu0 %v189
  %614 = vmatprep.subr.mxu0 0.0
  %615 = vmatpush1.msra.mxu0 %v188
  %616 = vmatprep.subr.mxu0 0.0
  %617 = vmatpush1.msra.mxu0 %v187
  %618 = vmatprep.subr.mxu0 0.0
  %619 = vmatpush2.msra.mxu0 0.0
  %620 = vmatprep.subr.mxu0 0.0
  %621 = vmatpush2.msra.mxu0 0.0
  %622 = vmatprep.subr.mxu0 0.0
  %623 = vmatpush2.msra.mxu0 0.0
  %624 = vmatprep.subr.mxu0 0.0
  %625 = vmatpush2.msra.mxu0 0.0
  %626 = vmatprep.subr.mxu0 0.0
  %627 = vmatpush2.msra.mxu0 0.0
  %628 = vmatprep.subr.mxu0 0.0
  %629 = vmatpush2.msra.mxu0 0.0
  %630 = vmatprep.subr.mxu0 0.0
  %631 = vmatpush2.msra.mxu0 0.0
  %632 = vmatprep.subr.mxu0 0.0
  %633 = vmatpush2.msra.mxu0 0.0
  %634 = vmatprep.subr.mxu0 0.0
  %635 = vmatpush2.msra.mxu0 0.0
  %636 = vmatprep.subr.mxu0 0.0
  %637 = vmatpush2.msra.mxu0 0.0
  %638 = vmatprep.subr.mxu0 0.0
  %639 = vmatpush2.msra.mxu0 0.0
  %640 = vmatprep.subr.mxu0 0.0
  %641 = vmatpush2.msra.mxu0 0.0
  %642 = vmatprep.subr.mxu0 0.0
  %643 = vmatpush2.msra.mxu0 0.0
  %644 = vmatprep.subr.mxu0 0.0
  %645 = vmatpush2.msra.mxu0 0.0
  %646 = vmatprep.subr.mxu0 0.0
  %647 = vmatpush2.msra.mxu0 0.0
  %648 = vmatprep.subr.mxu0 0.0
  %649 = vmatpush2.msra.mxu0 0.0
  %650 = vmatprep.mubr.f32.mxu0 0.0
  %651 = vmatmul.mubr.f32.gmra.mxu0 %v584
  %v652 = vpop.f32.mrf.mxu0
  %v653 = vadd.f32 0.0, %v652
  %v654 = vpop.f32.mrf.mxu0
  %655 = vdwg.mxu0
  %v656 = vadd.f32 %v582, %v653
  %v657 = vtanh.pop %v656
  %658 = vst.msk [vmem:[%s581] sm:$0xff] %vm178, %v657
  %s659 = scalar_lea.vmem [#allocation2], 48
  %v660 = vld [vmem:[%s659] sm:$0xff]
  %v662 = vsel %vm178, %v657, 0
  %664 = vmatprep.subr.mxu0 0.0
  %665 = vmatpush1.msra.mxu0 0.0
  %666 = vmatprep.subr.mxu0 0.0
  %667 = vmatpush1.msra.mxu0 0.0
  %668 = vmatprep.subr.mxu0 0.0
  %669 = vmatpush1.msra.mxu0 0.0
  %670 = vmatprep.subr.mxu0 0.0
  %671 = vmatpush1.msra.mxu0 0.0
  %672 = vmatprep.subr.mxu0 0.0
  %673 = vmatpush1.msra.mxu0 0.0
  %674 = vmatprep.subr.mxu0 0.0
  %675 = vmatpush1.msra.mxu0 0.0
  %676 = vmatprep.subr.mxu0 0.0
  %677 = vmatpush1.msra.mxu0 0.0
  %678 = vmatprep.subr.mxu0 0.0
  %679 = vmatpush1.msra.mxu0 0.0
  %680 = vmatprep.subr.mxu0 0.0
  %681 = vmatpush1.msra.mxu0 0.0
  %682 = vmatprep.subr.mxu0 0.0
  %683 = vmatpush1.msra.mxu0 0.0
  %684 = vmatprep.subr.mxu0 0.0
  %685 = vmatpush1.msra.mxu0 0.0
  %686 = vmatprep.subr.mxu0 0.0
  %687 = vmatpush1.msra.mxu0 0.0
  %688 = vmatprep.subr.mxu0 0.0
  %689 = vmatpush1.msra.mxu0 %v190
  %690 = vmatprep.subr.mxu0 0.0
  %691 = vmatpush1.msra.mxu0 %v189
  %692 = vmatprep.subr.mxu0 0.0
  %693 = vmatpush1.msra.mxu0 %v188
  %694 = vmatprep.subr.mxu0 0.0
  %695 = vmatpush1.msra.mxu0 %v187
  %696 = vmatprep.subr.mxu0 0.0
  %697 = vmatpush2.msra.mxu0 0.0
  %698 = vmatprep.subr.mxu0 0.0
  %699 = vmatpush2.msra.mxu0 0.0
  %700 = vmatprep.subr.mxu0 0.0
  %701 = vmatpush2.msra.mxu0 0.0
  %702 = vmatprep.subr.mxu0 0.0
  %703 = vmatpush2.msra.mxu0 0.0
  %704 = vmatprep.subr.mxu0 0.0
  %705 = vmatpush2.msra.mxu0 0.0
  %706 = vmatprep.subr.mxu0 0.0
  %707 = vmatpush2.msra.mxu0 0.0
  %708 = vmatprep.subr.mxu0 0.0
  %709 = vmatpush2.msra.mxu0 0.0
  %710 = vmatprep.subr.mxu0 0.0
  %711 = vmatpush2.msra.mxu0 0.0
  %712 = vmatprep.subr.mxu0 0.0
  %713 = vmatpush2.msra.mxu0 0.0
  %714 = vmatprep.subr.mxu0 0.0
  %715 = vmatpush2.msra.mxu0 0.0
  %716 = vmatprep.subr.mxu0 0.0
  %717 = vmatpush2.msra.mxu0 0.0
  %718 = vmatprep.subr.mxu0 0.0
  %719 = vmatpush2.msra.mxu0 0.0
  %720 = vmatprep.subr.mxu0 0.0
  %721 = vmatpush2.msra.mxu0 0.0
  %722 = vmatprep.subr.mxu0 0.0
  %723 = vmatpush2.msra.mxu0 0.0
  %724 = vmatprep.subr.mxu0 0.0
  %725 = vmatpush2.msra.mxu0 0.0
  %726 = vmatprep.subr.mxu0 0.0
  %727 = vmatpush2.msra.mxu0 0.0
  %728 = vmatprep.mubr.f32.mxu0 0.0
  %729 = vmatmul.mubr.f32.gmra.mxu0 %v662
  %v730 = vpop.f32.mrf.mxu0
  %v731 = vadd.f32 0.0, %v730
  %v732 = vpop.f32.mrf.mxu0
  %733 = vdwg.mxu0
  %v734 = vadd.f32 %v660, %v731
  %v735 = vtanh.pop %v734
  %736 = vst.msk [vmem:[%s659] sm:$0xff] %vm178, %v735
  %s737 = scalar_lea.vmem [#allocation2], 56
  %v738 = vld [vmem:[%s737] sm:$0xff]
  %v740 = vsel %vm178, %v735, 0
  %742 = vmatprep.subr.mxu0 0.0
  %743 = vmatpush1.msra.mxu0 0.0
  %744 = vmatprep.subr.mxu0 0.0
  %745 = vmatpush1.msra.mxu0 0.0
  %746 = vmatprep.subr.mxu0 0.0
  %747 = vmatpush1.msra.mxu0 0.0
  %748 = vmatprep.subr.mxu0 0.0
  %749 = vmatpush1.msra.mxu0 0.0
  %750 = vmatprep.subr.mxu0 0.0
  %751 = vmatpush1.msra.mxu0 0.0
  %752 = vmatprep.subr.mxu0 0.0
  %753 = vmatpush1.msra.mxu0 0.0
  %754 = vmatprep.subr.mxu0 0.0
  %755 = vmatpush1.msra.mxu0 0.0
  %756 = vmatprep.subr.mxu0 0.0
  %757 = vmatpush1.msra.mxu0 0.0
  %758 = vmatprep.subr.mxu0 0.0
  %759 = vmatpush1.msra.mxu0 0.0
  %760 = vmatprep.subr.mxu0 0.0
  %761 = vmatpush1.msra.mxu0 0.0
  %762 = vmatprep.subr.mxu0 0.0
  %763 = vmatpush1.msra.mxu0 0.0
  %764 = vmatprep.subr.mxu0 0.0
  %765 = vmatpush1.msra.mxu0 0.0
  %766 = vmatprep.subr.mxu0 0.0
  %767 = vmatpush1.msra.mxu0 %v190
  %768 = vmatprep.subr.mxu0 0.0
  %769 = vmatpush1.msra.mxu0 %v189
  %770 = vmatprep.subr.mxu0 0.0
  %771 = vmatpush1.msra.mxu0 %v188
  %772 = vmatprep.subr.mxu0 0.0
  %773 = vmatpush1.msra.mxu0 %v187
  %774 = vmatprep.subr.mxu0 0.0
  %775 = vmatpush2.msra.mxu0 0.0
  %776 = vmatprep.subr.mxu0 0.0
  %777 = vmatpush2.msra.mxu0 0.0
  %778 = vmatprep.subr.mxu0 0.0
  %779 = vmatpush2.msra.mxu0 0.0
  %780 = vmatprep.subr.mxu0 0.0
  %781 = vmatpush2.msra.mxu0 0.0
  %782 = vmatprep.subr.mxu0 0.0
  %783 = vmatpush2.msra.mxu0 0.0
  %784 = vmatprep.subr.mxu0 0.0
  %785 = vmatpush2.msra.mxu0 0.0
  %786 = vmatprep.subr.mxu0 0.0
  %787 = vmatpush2.msra.mxu0 0.0
  %788 = vmatprep.subr.mxu0 0.0
  %789 = vmatpush2.msra.mxu0 0.0
  %790 = vmatprep.subr.mxu0 0.0
  %791 = vmatpush2.msra.mxu0 0.0
  %792 = vmatprep.subr.mxu0 0.0
  %793 = vmatpush2.msra.mxu0 0.0
  %794 = vmatprep.subr.mxu0 0.0
  %795 = vmatpush2.msra.mxu0 0.0
  %796 = vmatprep.subr.mxu0 0.0
  %797 = vmatpush2.msra.mxu0 0.0
  %798 = vmatprep.subr.mxu0 0.0
  %799 = vmatpush2.msra.mxu0 0.0
  %800 = vmatprep.subr.mxu0 0.0
  %801 = vmatpush2.msra.mxu0 0.0
  %802 = vmatprep.subr.mxu0 0.0
  %803 = vmatpush2.msra.mxu0 0.0
  %804 = vmatprep.subr.mxu0 0.0
  %805 = vmatpush2.msra.mxu0 0.0
  %806 = vmatprep.mubr.f32.mxu0 0.0
  %807 = vmatmul.mubr.f32.gmra.mxu0 %v740
  %v808 = vpop.f32.mrf.mxu0
  %v809 = vadd.f32 0.0, %v808
  %v810 = vpop.f32.mrf.mxu0
  %811 = vdwg.mxu0
  %v812 = vadd.f32 %v738, %v809
  %v813 = vtanh.pop %v812
  %814 = vst.msk [vmem:[%s737] sm:$0xff] %vm178, %v813
  %815 = vst.msk [vmem:[%s8] sm:$0xff] %vm178, %v813
  %v816 = vld [vmem:[#allocation2] sm:$0xff]
  %v817 = vld [vmem:[#allocation2 + $0x8] sm:$0xff]
  %v818 = vld [vmem:[#allocation2 + $0x10] sm:$0xff]
  %v819 = vld [vmem:[#allocation2 + $0x18] sm:$0xff]
  %v820 = vld [vmem:[#allocation2 + $0x20] sm:$0xff]
  %v821 = vld [vmem:[#allocation2 + $0x28] sm:$0xff]
  %v822 = vld [vmem:[#allocation2 + $0x30] sm:$0xff]
  %v823 = vld [vmem:[#allocation2 + $0x38] sm:$0xff]
  %v824 = vld [vmem:[%s5] sm:$0xff]
  %v825 = vld [vmem:[%s5 + $0x8] sm:$0xff]
  %v826 = vld [vmem:[%s5 + $0x10] sm:$0xff]
  %v827 = vld [vmem:[%s5 + $0x18] sm:$0xff]
  %v828 = vld [vmem:[%s6] sm:$0x1]
  %v830 = vlaneseq
  %v831 = vshrl.u32 %v830, 7
  %v832 = vsub.s32 0, %v831
  %v833 = vrot.slane %v828, %v832
  %v836 = vsel %vm178, %v816, 0
  %v839 = vsel %vm178, %v817, 0
  %v842 = vsel %vm178, %v818, 0
  %v845 = vsel %vm178, %v819, 0
  %v848 = vsel %vm178, %v820, 0
  %v851 = vsel %vm178, %v821, 0
  %v854 = vsel %vm178, %v822, 0
  %v857 = vsel %vm178, %v823, 0
  %859 = vmatprep.subr.mxu0 0.0
  %860 = vmatpush1.msra.mxu0 0.0
  %861 = vmatprep.subr.mxu0 0.0
  %862 = vmatpush1.msra.mxu0 0.0
  %863 = vmatprep.subr.mxu0 0.0
  %864 = vmatpush1.msra.mxu0 0.0
  %865 = vmatprep.subr.mxu0 0.0
  %866 = vmatpush1.msra.mxu0 0.0
  %867 = vmatprep.subr.mxu0 0.0
  %868 = vmatpush1.msra.mxu0 0.0
  %869 = vmatprep.subr.mxu0 0.0
  %870 = vmatpush1.msra.mxu0 0.0
  %871 = vmatprep.subr.mxu0 0.0
  %872 = vmatpush1.msra.mxu0 0.0
  %873 = vmatprep.subr.mxu0 0.0
  %874 = vmatpush1.msra.mxu0 0.0
  %875 = vmatprep.subr.mxu0 0.0
  %876 = vmatpush1.msra.mxu0 0.0
  %877 = vmatprep.subr.mxu0 0.0
  %878 = vmatpush1.msra.mxu0 0.0
  %879 = vmatprep.subr.mxu0 0.0
  %880 = vmatpush1.msra.mxu0 0.0
  %881 = vmatprep.subr.mxu0 0.0
  %882 = vmatpush1.msra.mxu0 0.0
  %883 = vmatprep.subr.mxu0 0.0
  %884 = vmatpush1.msra.mxu0 %v827
  %885 = vmatprep.subr.mxu0 0.0
  %886 = vmatpush1.msra.mxu0 %v826
  %887 = vmatprep.subr.mxu0 0.0
  %888 = vmatpush1.msra.mxu0 %v825
  %889 = vmatprep.subr.mxu0 0.0
  %890 = vmatpush1.msra.mxu0 %v824
  %891 = vmatprep.subr.mxu0 0.0
  %892 = vmatpush2.msra.mxu0 0.0
  %893 = vmatprep.subr.mxu0 0.0
  %894 = vmatpush2.msra.mxu0 0.0
  %895 = vmatprep.subr.mxu0 0.0
  %896 = vmatpush2.msra.mxu0 0.0
  %897 = vmatprep.subr.mxu0 0.0
  %898 = vmatpush2.msra.mxu0 0.0
  %899 = vmatprep.subr.mxu0 0.0
  %900 = vmatpush2.msra.mxu0 0.0
  %901 = vmatprep.subr.mxu0 0.0
  %902 = vmatpush2.msra.mxu0 0.0
  %903 = vmatprep.subr.mxu0 0.0
  %904 = vmatpush2.msra.mxu0 0.0
  %905 = vmatprep.subr.mxu0 0.0
  %906 = vmatpush2.msra.mxu0 0.0
  %907 = vmatprep.subr.mxu0 0.0
  %908 = vmatpush2.msra.mxu0 0.0
  %909 = vmatprep.subr.mxu0 0.0
  %910 = vmatpush2.msra.mxu0 0.0
  %911 = vmatprep.subr.mxu0 0.0
  %912 = vmatpush2.msra.mxu0 0.0
  %913 = vmatprep.subr.mxu0 0.0
  %914 = vmatpush2.msra.mxu0 0.0
  %915 = vmatprep.subr.mxu0 0.0
  %916 = vmatpush2.msra.mxu0 0.0
  %917 = vmatprep.subr.mxu0 0.0
  %918 = vmatpush2.msra.mxu0 0.0
  %919 = vmatprep.subr.mxu0 0.0
  %920 = vmatpush2.msra.mxu0 0.0
  %921 = vmatprep.subr.mxu0 0.0
  %922 = vmatpush2.msra.mxu0 0.0
  %923 = vmatprep.mubr.f32.mxu0 0.0
  %924 = vmatmul.mubr.f32.gmra.mxu0 %v836
  %v925 = vpop.f32.mrf.mxu0
  %v926 = vadd.f32 %v833, %v925
  %v927 = vpop.f32.mrf.mxu0
  %928 = vmatprep.mubr.f32.mxu0 0.0
  %929 = vmatmul.mubr.f32.gmra.mxu0 %v839
  %v930 = vpop.f32.mrf.mxu0
  %v931 = vadd.f32 %v833, %v930
  %v932 = vpop.f32.mrf.mxu0
  %933 = vmatprep.mubr.f32.mxu0 0.0
  %934 = vmatmul.mubr.f32.gmra.mxu0 %v842
  %v935 = vpop.f32.mrf.mxu0
  %v936 = vadd.f32 %v833, %v935
  %v937 = vpop.f32.mrf.mxu0
  %938 = vmatprep.mubr.f32.mxu0 0.0
  %939 = vmatmul.mubr.f32.gmra.mxu0 %v845
  %v940 = vpop.f32.mrf.mxu0
  %v941 = vadd.f32 %v833, %v940
  %v942 = vpop.f32.mrf.mxu0
  %943 = vmatprep.mubr.f32.mxu0 0.0
  %944 = vmatmul.mubr.f32.gmra.mxu0 %v848
  %v945 = vpop.f32.mrf.mxu0
  %v946 = vadd.f32 %v833, %v945
  %v947 = vpop.f32.mrf.mxu0
  %948 = vmatprep.mubr.f32.mxu0 0.0
  %949 = vmatmul.mubr.f32.gmra.mxu0 %v851
  %v950 = vpop.f32.mrf.mxu0
  %v951 = vadd.f32 %v833, %v950
  %v952 = vpop.f32.mrf.mxu0
  %953 = vmatprep.mubr.f32.mxu0 0.0
  %954 = vmatmul.mubr.f32.gmra.mxu0 %v854
  %v955 = vpop.f32.mrf.mxu0
  %v956 = vadd.f32 %v833, %v955
  %v957 = vpop.f32.mrf.mxu0
  %958 = vmatprep.mubr.f32.mxu0 0.0
  %959 = vmatmul.mubr.f32.gmra.mxu0 %v857
  %v960 = vpop.f32.mrf.mxu0
  %v961 = vadd.f32 %v833, %v960
  %v962 = vpop.f32.mrf.mxu0
  %963 = vdwg.mxu0
  %vm964 = vcmask 130048
  %965 = vst.msk [vmem:[%s7] sm:$0xff] %vm964, %v926
  %966 = vst.msk [vmem:[%s7 + $0x8] sm:$0xff] %vm964, %v931
  %967 = vst.msk [vmem:[%s7 + $0x10] sm:$0xff] %vm964, %v936
  %968 = vst.msk [vmem:[%s7 + $0x18] sm:$0xff] %vm964, %v941
  %969 = vst.msk [vmem:[%s7 + $0x20] sm:$0xff] %vm964, %v946
  %970 = vst.msk [vmem:[%s7 + $0x28] sm:$0xff] %vm964, %v951
  %971 = vst.msk [vmem:[%s7 + $0x30] sm:$0xff] %vm964, %v956
  %972 = vst.msk [vmem:[%s7 + $0x38] sm:$0xff] %vm964, %v961
  // Predicated region
  $region30: #{many_to_one_with_linear.1} parent=0 // pred_check
    _
  $region31: #{many_to_one_with_linear.1} parent=0 // pred_check_branch
    %974 = sbr.rel (0) target = $region33
  $region32: #{many_to_one_with_linear.1} parent=0 // pred_region
    _
  $region33: #{many_to_one_with_linear.1} parent=0 // pred_fallthru
    _
  // Predicated region
  $region34: #{many_to_one_with_linear.1} parent=0 // pred_check
    _
  $region35: #{many_to_one_with_linear.1} parent=0 // pred_check_branch
    %976 = sbr.rel (0) target = $region37
  $region36: #{many_to_one_with_linear.1} parent=0 // pred_region
    _
  $region37: #{many_to_one_with_linear.1} parent=0 // pred_fallthru
    _
  // Predicated region
  $region38: #{many_to_one_with_linear.1} parent=0 // pred_check
    _
  $region39: #{many_to_one_with_linear.1} parent=0 // pred_check_branch
    %978 = sbr.rel (0) target = $region41
  $region40: #{many_to_one_with_linear.1} parent=0 // pred_region
    _
  $region41: #{many_to_one_with_linear.1} parent=0 // pred_fallthru
    _
  // Predicated region
  $region42: #{many_to_one_with_linear.1} parent=0 // pred_check
    _
  $region43: #{many_to_one_with_linear.1} parent=0 // pred_check_branch
    %980 = sbr.rel (0) target = $region45
  $region44: #{many_to_one_with_linear.1} parent=0 // pred_region
    _
  $region45: #{many_to_one_with_linear.1} parent=0 // pred_fallthru
    _

</llo_original>
